<compile_context>
chip_gen: v7x
topology: tpu7x:2x2x1
jax: 0.10.0
libtpu: 0.0.40
codegen_flags: <defaults>
</compile_context>

<pallas_src>
import functools

import jax
import jax.numpy as jnp
from jax.experimental import pallas as pl
from jax.experimental.pallas import tpu as pltpu


def _channel_attention_kernel(x_ref, w1_ref, w2_ref, o_ref, acc_ref, *,
                              hw, t_hw, num_k, needs_mask):
    # x_ref:  (1, C, t_hw)  lane-dense spatial tile of one batch element
    # w1_ref: (hidden, C)   fc1 weight (squeezed 1x1 conv)
    # w2_ref: (C, hidden)   fc2 weight
    # o_ref:  (1, 1, C)     per-batch output row, C on lanes
    # acc_ref:(C, t_hw)     f32 running elementwise-max accumulator
    k = pl.program_id(1)

    @pl.when(k == 0)
    def _():
        acc_ref[...] = jnp.full_like(acc_ref, -jnp.inf)

    x = x_ref[0].astype(jnp.float32)                      # (C, t_hw)
    if needs_mask:
        # Mask out-of-range lanes of the ragged last tile with -inf.
        lane = jax.lax.broadcasted_iota(jnp.int32, x.shape, 1)
        valid = (k * t_hw + lane) < hw
        x = jnp.where(valid, x, -jnp.inf)

    # Elementwise running max on the VPU; cross-lane reduce deferred to finalize.
    acc_ref[...] = jnp.maximum(acc_ref[...], x)

    @pl.when(k == num_k - 1)
    def _():
        # Single cross-lane reduce -> global max pool result (C, 1).
        pooled = jnp.max(acc_ref[...], axis=-1, keepdims=True)        # (C, 1)
        # fc1 (no bias) + ReLU.
        h = jnp.dot(w1_ref[...].astype(jnp.float32), pooled,
                    preferred_element_type=jnp.float32)               # (hidden, 1)
        h = jnp.maximum(h, 0.0)
        # fc2 (no bias).
        out = jnp.dot(w2_ref[...].astype(jnp.float32), h,
                      preferred_element_type=jnp.float32)             # (C, 1)
        # Sigmoid, relayout to lane-dense (1, 1, C) and store once per batch.
        o_ref[...] = jax.nn.sigmoid(out).reshape(o_ref.shape).astype(o_ref.dtype)


def channel_attention(x, w1, w2, *, hw_tile_target=512):
    """x: (B, C, H, W) NCHW.  w1: (C//16, C).  w2: (C, C//16).  Returns (B, C, 1, 1)."""
    B, C, H, W = x.shape
    hidden = w1.shape[0]
    assert w1.shape == (hidden, C) and w2.shape == (C, hidden)

    HW = H * W
    x3 = x.reshape(B, C, HW)                              # free, contiguous

    # Lane-dense spatial tile: full HW if small, else a 128-multiple <= target.
    if HW <= hw_tile_target:
        t_hw = HW
    else:
        t_hw = max(128, (hw_tile_target // 128) * 128)
    num_k = pl.cdiv(HW, t_hw)
    needs_mask = (HW % t_hw) != 0

    kernel = functools.partial(
        _channel_attention_kernel,
        hw=HW, t_hw=t_hw, num_k=num_k, needs_mask=needs_mask,
    )

    out = pl.pallas_call(
        kernel,
        out_shape=jax.ShapeDtypeStruct((B, 1, C), x.dtype),
        grid_spec=pltpu.PrefetchScalarGridSpec(
            num_scalar_prefetch=0,
            grid=(B, num_k),
            in_specs=[
                pl.BlockSpec((1, C, t_hw), lambda b, k: (b, 0, k)),
                pl.BlockSpec((hidden, C), lambda b, k: (0, 0)),
                pl.BlockSpec((C, hidden), lambda b, k: (0, 0)),
            ],
            out_specs=pl.BlockSpec((1, 1, C), lambda b, k: (b, 0, 0)),
            scratch_shapes=[pltpu.VMEM((C, t_hw), jnp.float32)],
        ),
        compiler_params=pltpu.CompilerParams(
            dimension_semantics=("parallel", "arbitrary"),
        ),
    )(x3, w1, w2)

    return out.reshape(B, C, 1, 1)


def channel_attention_ref(x, w1, w2):
    # Pure-JAX reference for correctness check.
    pooled = jnp.max(x, axis=(2, 3))                      # (B, C)
    h = jnp.maximum(pooled @ w1.T, 0.0)                   # (B, hidden)
    out = h @ w2.T                                        # (B, C)
    return jax.nn.sigmoid(out)[:, :, None, None]          # (B, C, 1, 1)


def _run_case(key, B, C, H, W):
    hidden = C // 16
    kx, k1, k2 = jax.random.split(key, 3)
    x = jax.random.normal(kx, (B, C, H, W), dtype=jnp.float32)
    w1 = 0.1 * jax.random.normal(k1, (hidden, C), dtype=jnp.float32)
    w2 = 0.1 * jax.random.normal(k2, (C, hidden), dtype=jnp.float32)

    out = jax.block_until_ready(channel_attention(x, w1, w2))
    ref = channel_attention_ref(x, w1, w2)
    assert out.shape == (B, C, 1, 1)
    assert jnp.allclose(out, ref, atol=1e-5, rtol=1e-5)


if __name__ == "__main__":
    key = jax.random.PRNGKey(0)
    k_a, k_b = jax.random.split(key)

    # Primary small case (in_planes >= 16 so in_planes // 16 >= 1).
    _run_case(k_a, B=2, C=32, H=16, W=16)      # HW=256 -> single spatial tile
    # Also exercise the multi-tile reduction + ragged-tail masking path.
    _run_case(k_b, B=2, C=32, H=24, W=24)      # HW=576 -> 2 tiles, masked tail

    print("KERNEL_OK")
</pallas_src>

<mosaic_0001>
module attributes {stable_mosaic.version = 11 : i64} {
  func.func @_channel_attention_kernel(%arg0: i32, %arg1: i32, %arg2: memref<1x32x256xf32, #tpu.memory_space<vmem>>, %arg3: memref<2x32xf32, #tpu.memory_space<vmem>>, %arg4: memref<32x2xf32, #tpu.memory_space<vmem>>, %arg5: memref<1x1x32xf32, #tpu.memory_space<vmem>>, %arg6: memref<32x256xf32, #tpu.memory_space<vmem>>) attributes {dimension_semantics = [#tpu.dimension_semantics<parallel>, #tpu.dimension_semantics<arbitrary>], iteration_bounds = array<i64: 2, 1>, scalar_prefetch = 0 : i64, scratch_operands = 1 : i64, tpu.core_type = #tpu.core_type<tc>, window_params = [{transform_indices = @transform_0, window_bounds = array<i64: 1, 32, 256>}, {pipeline_mode = #tpu.pipeline_mode<synchronous>, transform_indices = @transform_1, window_bounds = array<i64: 2, 32>}, {pipeline_mode = #tpu.pipeline_mode<synchronous>, transform_indices = @transform_2, window_bounds = array<i64: 32, 2>}, {transform_indices = @transform_3, window_bounds = array<i64: 1, 1, 32>}]} {
    %c0_i32 = arith.constant 0 : i32
    %0 = arith.cmpi eq, %arg1, %c0_i32 : i32
    %1 = arith.extui %0 : i1 to i32
    %c0_i32_0 = arith.constant 0 : i32
    %2 = arith.cmpi ne, %1, %c0_i32_0 : i32
    scf.if %2 {
      %cst = arith.constant 0xFF800000 : f32
      %11 = vector.broadcast %cst : f32 to vector<32x256xf32>
      %c0_9 = arith.constant 0 : index
      %c0_10 = arith.constant 0 : index
      %12 = vector.load %arg6[%c0_9, %c0_10] : memref<32x256xf32, #tpu.memory_space<vmem>>, vector<32x256xf32>
      tpu.vector_store %arg6[%c0_9, %c0_10], %11 {strides = array<i32>} : memref<32x256xf32, #tpu.memory_space<vmem>>, vector<32x256xf32>,
    } else {
    }
    %c0 = arith.constant 0 : index
    %c0_1 = arith.constant 0 : index
    %c0_2 = arith.constant 0 : index
    %3 = vector.load %arg2[%c0, %c0_1, %c0_2] : memref<1x32x256xf32, #tpu.memory_space<vmem>>, vector<1x32x256xf32>
    %4 = vector.shape_cast %3 : vector<1x32x256xf32> to vector<32x256xf32>
    %c0_3 = arith.constant 0 : index
    %c0_4 = arith.constant 0 : index
    %5 = vector.load %arg6[%c0_3, %c0_4] : memref<32x256xf32, #tpu.memory_space<vmem>>, vector<32x256xf32>
    %6 = arith.maximumf %5, %4 : vector<32x256xf32>
    %c0_5 = arith.constant 0 : index
    %c0_6 = arith.constant 0 : index
    %7 = vector.load %arg6[%c0_5, %c0_6] : memref<32x256xf32, #tpu.memory_space<vmem>>, vector<32x256xf32>
    tpu.vector_store %arg6[%c0_5, %c0_6], %6 {strides = array<i32>} : memref<32x256xf32, #tpu.memory_space<vmem>>, vector<32x256xf32>,
    %c0_i32_7 = arith.constant 0 : i32
    %8 = arith.cmpi eq, %arg1, %c0_i32_7 : i32
    %9 = arith.extui %8 : i1 to i32
    %c0_i32_8 = arith.constant 0 : i32
    %10 = arith.cmpi ne, %9, %c0_i32_8 : i32
    scf.if %10 {
      %c0_9 = arith.constant 0 : index
      %c0_10 = arith.constant 0 : index
      %11 = vector.load %arg6[%c0_9, %c0_10] : memref<32x256xf32, #tpu.memory_space<vmem>>, vector<32x256xf32>
      %cst = arith.constant dense<0xFF800000> : vector<32xf32>
      %12 = vector.multi_reduction <maximumf>, %11, %cst [1] : vector<32x256xf32> to vector<32xf32>
      %13 = vector.shape_cast %12 : vector<32xf32> to vector<32x1xf32>
      %c0_11 = arith.constant 0 : index
      %c0_12 = arith.constant 0 : index
      %14 = vector.load %arg3[%c0_11, %c0_12] : memref<2x32xf32, #tpu.memory_space<vmem>>, vector<2x32xf32>
      %cst_13 = arith.constant dense<0.000000e+00> : vector<2x1xf32>
      %15 = tpu.matmul %14, %13, %cst_13 {dimension_numbers = #tpu.dot_dimension_numbers<[1], [0], [0], [1], [0, 0, 1, 1], [], []>} : vector<2x32xf32>, vector<32x1xf32>, vector<2x1xf32> -> vector<2x1xf32>
      %cst_14 = arith.constant 0.000000e+00 : f32
      %16 = vector.broadcast %cst_14 : f32 to vector<2x1xf32>
      %17 = arith.maximumf %15, %16 : vector<2x1xf32>
      %c0_15 = arith.constant 0 : index
      %c0_16 = arith.constant 0 : index
      %18 = vector.load %arg4[%c0_15, %c0_16] : memref<32x2xf32, #tpu.memory_space<vmem>>, vector<32x2xf32>
      %cst_17 = arith.constant dense<0.000000e+00> : vector<32x1xf32>
      %19 = tpu.matmul %18, %17, %cst_17 {dimension_numbers = #tpu.dot_dimension_numbers<[1], [0], [0], [1], [0, 0, 1, 1], [], []>} : vector<32x2xf32>, vector<2x1xf32>, vector<32x1xf32> -> vector<32x1xf32>
      %20 = arith.negf %19 : vector<32x1xf32>
      %21 = math.exp %20 : vector<32x1xf32>
      %cst_18 = arith.constant 1.000000e+00 : f32
      %22 = vector.broadcast %cst_18 : f32 to vector<32x1xf32>
      %23 = arith.addf %22, %21 : vector<32x1xf32>
      %24 = arith.divf %22, %23 : vector<32x1xf32>
      %25 = vector.shape_cast %24 : vector<32x1xf32> to vector<1x1x32xf32>
      %c0_19 = arith.constant 0 : index
      %c0_20 = arith.constant 0 : index
      %c0_21 = arith.constant 0 : index
      %26 = vector.load %arg5[%c0_19, %c0_20, %c0_21] : memref<1x1x32xf32, #tpu.memory_space<vmem>>, vector<1x1x32xf32>
      tpu.vector_store %arg5[%c0_19, %c0_20, %c0_21], %25 {strides = array<i32>} : memref<1x1x32xf32, #tpu.memory_space<vmem>>, vector<1x1x32xf32>,
    } else {
    }
    return
  }
  func.func @transform_0(%arg0: i32, %arg1: i32) -> (i32, i32, i32) {
    %c0_i32 = arith.constant 0 : i32
    %c0_i32_0 = arith.constant 0 : i32
    return %arg0, %c0_i32, %arg1 : i32, i32, i32
  }
  func.func @transform_1(%arg0: i32, %arg1: i32) -> (i32, i32) {
    %c0_i32 = arith.constant 0 : i32
    %c0_i32_0 = arith.constant 0 : i32
    %c0_i32_1 = arith.constant 0 : i32
    return %c0_i32, %c0_i32_0 : i32, i32
  }
  func.func @transform_2(%arg0: i32, %arg1: i32) -> (i32, i32) {
    %c0_i32 = arith.constant 0 : i32
    %c0_i32_0 = arith.constant 0 : i32
    %c0_i32_1 = arith.constant 0 : i32
    return %c0_i32, %c0_i32_0 : i32, i32
  }
  func.func @transform_3(%arg0: i32, %arg1: i32) -> (i32, i32, i32) {
    %c0_i32 = arith.constant 0 : i32
    %c0_i32_0 = arith.constant 0 : i32
    %c0_i32_1 = arith.constant 0 : i32
    return %arg0, %c0_i32, %c0_i32_0 : i32, i32, i32
  }
}

</mosaic_0001>

<llo_original>
// kernel: tpu_custom_call.1
$region0: #{tpu_custom_call.1}
  #allocation0 [shape = 'u32[]', space=smem, size = 0x4, offset = 0x4, fixed_abs, tag = 'smem constant byte address 0x4 - core index']
  #allocation1 [shape = 'u32[144,128]{1,0:T(1,128)}', space=vmem, size = 0x12000, scoped, tag = 'internal scratch']
  #allocation2 [shape = 'f32[32,256]{1,0:T(8,128)}', space=vmem, size = 0x8000, scoped, tag = 'scratch operand']
  %s0 = inlined_call_operand.hbm [shape: f32[2,32,256], index: 0, kind: input, shape index: {}]
  %s1 = inlined_call_operand.vmem [shape: f32[2,32], index: 1, kind: input, shape index: {}]
  %s2 = inlined_call_operand.vmem [shape: f32[32,2], index: 2, kind: input, shape index: {}]
  %s3 = inlined_call_operand.hbm [shape: f32[2,1,32], index: 3, kind: output, shape index: {}]
  %s4 = sld [smem:[#allocation0]]
  $region57: #{tpu_custom_call.1} parent=0
    _
  %s6 = ssub.s32 1, %s4
  %s7 = scalar_select 0, %s6, %s4
  $region1: #{tpu_custom_call.1} parent=0
    #allocation3 [shape = 'u8[65536]{0}', space=vmem, size = 0x10000, scoped, tag = 'input window, operand 0']
    #allocation4 [shape = 's32[2]{0}', space=sflag, size = 0x8, scoped, tag = 'scoped memory for tpu_custom_call.1']
    #allocation5 [shape = 's32[2]{0}', space=sflag, size = 0x8, scoped, tag = 'scoped memory for tpu_custom_call.1']
    #allocation6 [shape = 'u8[1024]{0}', space=vmem, size = 0x400, scoped, tag = 'output window, operand 0']
    %8 = vsyncpa [#allocation4], 0
    %s9 = scalar_lea.sflag [#allocation4], 1
    %10 = vsyncpa %s9, 0
    %11 = vsyncpa [#allocation5], 0
    %s12 = scalar_lea.sflag [#allocation5], 1
    %13 = vsyncpa %s12, 0
    loop: start=0, step=1, limit=4
    $region2: #{tpu_custom_call.1} parent=1 // loop_pre_header
      _
    $region3: #{tpu_custom_call.1} parent=1 // loop_header
      %s15 = sphi 0, %s19
      %p16 = scmp.ge.s32.totalorder %s15, 4
      %s22 = sphi 0, %s34
      %s23 = sphi 0, %s30
      %s24 = sphi 0, %s22
      %s25 = sphi 0, %s23
      %s26 = sphi 0, %s24
      %s27 = sphi 0, %s25
      %s39 = sphi 0, %s41
      %s42 = sphi 0, %s39
      %s43 = sphi 0, %s42
      %s59 = sphi 0, %s43
      %s63 = sphi 0, %s63
      %s65 = sphi 0, %s63
      %s66 = sphi 0, %s65
      %s80 = sphi 0, %s66
      %s84 = sphi 0, %s84
      %s86 = sphi 0, %s84
      %s87 = sphi 0, %s86
      %s101 = sphi 0, %s87
      %s107 = sphi 0, %s109
      %s110 = sphi 0, %s107
      %s111 = sphi 0, %s110
      %s127 = sphi 0, %s111
    $region4: #{tpu_custom_call.1} parent=1 // loop_header_branch
      %18 = sbr.rel (%p16) target = $region8
    $region5: #{tpu_custom_call.1} parent=1 // loop_body
      %s20 = ssub.s32 %s15, 1
      %s21 = ssub.s32 %s15, 2
      %s28 = sadd.s32 1, %s23
      %p29 = scmp.ge.s32.totalorder %s28, 1
      %s30 = scalar_select %p29, 0, %s28
      %s31 = sadd.s32 1, %s22
      %s32 = scalar_select %p29, %s31, %s22
      %p33 = scmp.ge.s32.totalorder %s32, 2
      %s34 = scalar_select %p33, 0, %s32
      %s35 = ssub.s32 %s22, %s34
      %s36 = ssub.s32 %s23, %s30
      %s37 = sor.u32 %s35, %s36
      %p38 = scmp.eq.s32.totalorder %s37, 0
      %s40 = sadd.s32 %s39, 1
      %s41 = scalar_select %p38, %s39, %s40
      %p44 = pneg %p38
      %p45 = scmp.eq.s32.totalorder %s15, 1
      %p46 = por %p44, %p45
      %p47 = scmp.ne.s32.totalorder %s39, %s42
      %p48 = scmp.eq.s32.totalorder %s15, 0
      %p49 = por %p47, %p48
      %p50 = scmp.ne.s32.totalorder %s39, %s42
      %p51 = scmp.eq.s32.totalorder %s20, 1
      %p52 = por %p50, %p51
      %p53 = scmp.ne.s32.totalorder %s42, %s43
      %p54 = scmp.eq.s32.totalorder %s20, 0
      %p55 = por %p53, %p54
      %p56 = scmp.ne.s32.totalorder %s42, %s43
      %p57 = scmp.eq.s32.totalorder %s21, 1
      %p58 = por %p56, %p57
      %p60 = scmp.ne.s32.totalorder %s43, %s59
      %p61 = scmp.eq.s32.totalorder %s21, 0
      %p62 = por %p60, %p61
      %s64 = sadd.s32 %s63, 1
      %p67 = scmp.eq.s32.totalorder %s15, 1
      %p68 = scmp.ne.s32.totalorder %s63, %s65
      %p69 = scmp.eq.s32.totalorder %s15, 0
      %p70 = por %p68, %p69
      %p71 = scmp.ne.s32.totalorder %s63, %s65
      %p72 = scmp.eq.s32.totalorder %s20, 1
      %p73 = por %p71, %p72
      %p74 = scmp.ne.s32.totalorder %s65, %s66
      %p75 = scmp.eq.s32.totalorder %s20, 0
      %p76 = por %p74, %p75
      %p77 = scmp.ne.s32.totalorder %s65, %s66
      %p78 = scmp.eq.s32.totalorder %s21, 1
      %p79 = por %p77, %p78
      %p81 = scmp.ne.s32.totalorder %s66, %s80
      %p82 = scmp.eq.s32.totalorder %s21, 0
      %p83 = por %p81, %p82
      %s85 = sadd.s32 %s84, 1
      %p88 = scmp.eq.s32.totalorder %s15, 1
      %p89 = scmp.ne.s32.totalorder %s84, %s86
      %p90 = scmp.eq.s32.totalorder %s15, 0
      %p91 = por %p89, %p90
      %p92 = scmp.ne.s32.totalorder %s84, %s86
      %p93 = scmp.eq.s32.totalorder %s20, 1
      %p94 = por %p92, %p93
      %p95 = scmp.ne.s32.totalorder %s86, %s87
      %p96 = scmp.eq.s32.totalorder %s20, 0
      %p97 = por %p95, %p96
      %p98 = scmp.ne.s32.totalorder %s86, %s87
      %p99 = scmp.eq.s32.totalorder %s21, 1
      %p100 = por %p98, %p99
      %p102 = scmp.ne.s32.totalorder %s87, %s101
      %p103 = scmp.eq.s32.totalorder %s21, 0
      %p104 = por %p102, %p103
      %s105 = ssub.s32 %s22, %s34
      %p106 = scmp.eq.s32.totalorder %s105, 0
      %s108 = sadd.s32 %s107, 1
      %s109 = scalar_select %p106, %s107, %s108
      %p112 = pneg %p106
      %p113 = scmp.eq.s32.totalorder %s15, 1
      %p114 = por %p112, %p113
      %p115 = scmp.ne.s32.totalorder %s107, %s110
      %p116 = scmp.eq.s32.totalorder %s15, 0
      %p117 = por %p115, %p116
      %p118 = scmp.ne.s32.totalorder %s107, %s110
      %p119 = scmp.eq.s32.totalorder %s20, 1
      %p120 = por %p118, %p119
      %p121 = scmp.ne.s32.totalorder %s110, %s111
      %p122 = scmp.eq.s32.totalorder %s20, 0
      %p123 = por %p121, %p122
      %p124 = scmp.ne.s32.totalorder %s110, %s111
      %p125 = scmp.eq.s32.totalorder %s21, 1
      %p126 = por %p124, %p125
      %p128 = scmp.ne.s32.totalorder %s111, %s127
      %p129 = scmp.eq.s32.totalorder %s21, 0
      %p130 = por %p128, %p129
      %p131 = scmp.le.s32.totalorder 1, %s15
      %p132 = scmp.lt.s32.totalorder %s15, 3
      %p133 = pnand %p131, %p132
      %p134 = pneg %p133
      // Predicated region
      $region9: #{tpu_custom_call.1} parent=5 // pred_check
        _
      $region10: #{tpu_custom_call.1} parent=5 // pred_check_branch
        %136 = sbr.rel (%p133) target = $region12
      $region11: #{tpu_custom_call.1} parent=5 // pred_region
        %s137 = ssub.s32 %s15, 1
        // Predicated region
        $region13: #{tpu_custom_call.1} parent=11 // pred_check
          %p138 = pneg %p76
        $region14: #{tpu_custom_call.1} parent=11 // pred_check_branch
          %140 = sbr.rel (%p138) target = $region16
        $region15: #{tpu_custom_call.1} parent=11 // pred_region
          _
        $region16: #{tpu_custom_call.1} parent=11 // pred_fallthru
          _
        // Predicated region
        $region17: #{tpu_custom_call.1} parent=11 // pred_check
          %p141 = pneg %p97
        $region18: #{tpu_custom_call.1} parent=11 // pred_check_branch
          %143 = sbr.rel (%p141) target = $region20
        $region19: #{tpu_custom_call.1} parent=11 // pred_region
          _
        $region20: #{tpu_custom_call.1} parent=11 // pred_fallthru
          _
      $region12: #{tpu_custom_call.1} parent=5 // pred_fallthru
        _
      %p144 = scmp.lt.s32.totalorder %s15, 2
      // Predicated region
      $region21: #{tpu_custom_call.1} parent=5 // pred_check
        %p145 = pneg %p144
      $region22: #{tpu_custom_call.1} parent=5 // pred_check_branch
        %147 = sbr.rel (%p145) target = $region24
      $region23: #{tpu_custom_call.1} parent=5 // pred_region
        // Predicated region
        $region25: #{tpu_custom_call.1} parent=23 // pred_check
          %p148 = pneg %p49
        $region26: #{tpu_custom_call.1} parent=23 // pred_check_branch
          %150 = sbr.rel (%p148) target = $region28
        $region27: #{tpu_custom_call.1} parent=23 // pred_region
          %s151 = sand.u32 %s39, 1
          %s152 = scalar_lea.sflag [#allocation4], %s151
          %s153 = sand.u32 %s39, 1
          %s154 = smul.addr %s153, 64
          %s155 = scalar_lea.vmem [#allocation3], %s154
          %s156 = smul.u32 2, %s23
          %s158 = ssub.s32 1024, 1024
          %159 = vsyncadd %s152, %s158
          %s160 = smul.addr %s22, 8
          %s161 = sadd.s32 %s156, %s160
          %s162 = smul.addr %s161, 128
          %s163 = scalar_lea.hbm %s0, %s162
          %s164 = sshll.u32 %s155, 4
          %s165 = int_to_ptr.vmem [resolvable:$true] %s164
          %170 = dma.hbm_to_vmem [thread:$0]  %s163, 1024, %s165, %s152, 256, 256, 16
        $region28: #{tpu_custom_call.1} parent=23 // pred_fallthru
          _
      $region24: #{tpu_custom_call.1} parent=5 // pred_fallthru
        _
      %p171 = scmp.le.s32.totalorder 1, %s15
      %p172 = scmp.lt.s32.totalorder %s15, 3
      %p173 = pnand %p171, %p172
      %p174 = pneg %p173
      // Predicated region
      $region29: #{tpu_custom_call.1} parent=5 // pred_check
        _
      $region30: #{tpu_custom_call.1} parent=5 // pred_check_branch
        %176 = sbr.rel (%p173) target = $region32
      $region31: #{tpu_custom_call.1} parent=5 // pred_region
        %s177 = ssub.s32 %s15, 1
        %s178 = sand.u32 %s42, 1
        %s179 = scalar_lea.sflag [#allocation4], %s178
        %s180 = sand.u32 %s42, 1
        %s181 = smul.addr %s180, 64
        %s182 = scalar_lea.vmem [#allocation3], %s181
        // Predicated region
        $region33: #{tpu_custom_call.1} parent=31 // pred_check
          %p183 = pneg %p55
        $region34: #{tpu_custom_call.1} parent=31 // pred_check_branch
          %185 = sbr.rel (%p183) target = $region36
        $region35: #{tpu_custom_call.1} parent=31 // pred_region
          %186 = dma.done %s179, 1024
        $region36: #{tpu_custom_call.1} parent=31 // pred_fallthru
          _
        %s187 = sand.u32 %s42, 1
        %s188 = scalar_lea.sflag [#allocation4], %s187
        %s189 = sand.u32 %s42, 1
        %s190 = smul.addr %s189, 64
        %s191 = scalar_lea.vmem [#allocation3], %s190
        %p192 = pneg %p55
        %p193 = pneg %p52
        %p194 = pneg %p76
        %p195 = pneg %p73
        %p196 = pneg %p97
        %p197 = pneg %p94
        %p198 = pneg %p123
        %p199 = pneg %p120
        %s200 = sand.u32 %s110, 1
        %s201 = scalar_lea.sflag [#allocation5], %s200
        %s202 = sand.u32 %s110, 1
        %s203 = scalar_lea.vmem [#allocation6], %s202
        %s204 = smul.u32 2, %s25
        %p205 = scmp.eq.s32.totalorder %s25, 0
        // Predicated region
        $region37: #{tpu_custom_call.1} parent=31 // pred_check
          %p206 = pneg %p205
        $region38: #{tpu_custom_call.1} parent=31 // pred_check_branch
          %208 = sbr.rel (%p206) target = $region40
        $region39: #{tpu_custom_call.1} parent=31 // pred_region
          %209 = vst [vmem:[#allocation2] sm:$0xff] -inf
          %210 = vst [vmem:[#allocation2 + $0x8] sm:$0xff] -inf
          %211 = vst [vmem:[#allocation2 + $0x10] sm:$0xff] -inf
          %212 = vst [vmem:[#allocation2 + $0x18] sm:$0xff] -inf
          %213 = vst [vmem:[#allocation2 + $0x20] sm:$0xff] -inf
          %214 = vst [vmem:[#allocation2 + $0x28] sm:$0xff] -inf
          %215 = vst [vmem:[#allocation2 + $0x30] sm:$0xff] -inf
          %216 = vst [vmem:[#allocation2 + $0x38] sm:$0xff] -inf
        $region40: #{tpu_custom_call.1} parent=31 // pred_fallthru
          _
        %v217 = vld [vmem:[%s182] sm:$0xff]
        %v218 = vld [vmem:[%s182 + $0x8] sm:$0xff]
        %v219 = vld [vmem:[%s182 + $0x10] sm:$0xff]
        %v220 = vld [vmem:[%s182 + $0x18] sm:$0xff]
        %v221 = vld [vmem:[%s182 + $0x20] sm:$0xff]
        %v222 = vld [vmem:[%s182 + $0x28] sm:$0xff]
        %v223 = vld [vmem:[%s182 + $0x30] sm:$0xff]
        %v224 = vld [vmem:[%s182 + $0x38] sm:$0xff]
        %v225 = vld [vmem:[#allocation2] sm:$0xff]
        %v226 = vld [vmem:[#allocation2 + $0x8] sm:$0xff]
        %v227 = vld [vmem:[#allocation2 + $0x10] sm:$0xff]
        %v228 = vld [vmem:[#allocation2 + $0x18] sm:$0xff]
        %v229 = vld [vmem:[#allocation2 + $0x20] sm:$0xff]
        %v230 = vld [vmem:[#allocation2 + $0x28] sm:$0xff]
        %v231 = vld [vmem:[#allocation2 + $0x30] sm:$0xff]
        %v232 = vld [vmem:[#allocation2 + $0x38] sm:$0xff]
        %v233 = vmax.f32 %v225, %v217
        %v234 = vmax.f32 %v226, %v218
        %v235 = vmax.f32 %v227, %v219
        %v236 = vmax.f32 %v228, %v220
        %v237 = vmax.f32 %v229, %v221
        %v238 = vmax.f32 %v230, %v222
        %v239 = vmax.f32 %v231, %v223
        %v240 = vmax.f32 %v232, %v224
        %241 = vst [vmem:[#allocation2] sm:$0xff] %v233
        %242 = vst [vmem:[#allocation2 + $0x8] sm:$0xff] %v234
        %243 = vst [vmem:[#allocation2 + $0x10] sm:$0xff] %v235
        %244 = vst [vmem:[#allocation2 + $0x18] sm:$0xff] %v236
        %245 = vst [vmem:[#allocation2 + $0x20] sm:$0xff] %v237
        %246 = vst [vmem:[#allocation2 + $0x28] sm:$0xff] %v238
        %247 = vst [vmem:[#allocation2 + $0x30] sm:$0xff] %v239
        %248 = vst [vmem:[#allocation2 + $0x38] sm:$0xff] %v240
        // Predicated region
        $region41: #{tpu_custom_call.1} parent=31 // pred_check
          %p249 = pneg %p205
        $region42: #{tpu_custom_call.1} parent=31 // pred_check_branch
          %251 = sbr.rel (%p249) target = $region44
        $region43: #{tpu_custom_call.1} parent=31 // pred_region
          %v252 = vld [vmem:[#allocation2] sm:$0xff]
          %v253 = vld [vmem:[#allocation2 + $0x8] sm:$0xff]
          %v254 = vld [vmem:[#allocation2 + $0x10] sm:$0xff]
          %v255 = vld [vmem:[#allocation2 + $0x18] sm:$0xff]
          %v256 = vld [vmem:[#allocation2 + $0x20] sm:$0xff]
          %v257 = vld [vmem:[#allocation2 + $0x28] sm:$0xff]
          %v258 = vld [vmem:[#allocation2 + $0x30] sm:$0xff]
          %v259 = vld [vmem:[#allocation2 + $0x38] sm:$0xff]
          %v260 = vmax.f32 %v252, %v253
          %261 = vmax.xlane.f32.xlu0 %v260
          %v262 = vpop.xlane.xlu0 %261
          %v263 = vmax.f32 %v254, %v255
          %264 = vmax.xlane.f32.xlu0 %v263
          %v265 = vpop.xlane.xlu0 %264
          %v266 = vmax.f32 %v256, %v257
          %267 = vmax.xlane.f32.xlu0 %v266
          %v268 = vpop.xlane.xlu0 %267
          %v269 = vmax.f32 %v258, %v259
          %270 = vmax.xlane.f32.xlu0 %v269
          %v271 = vpop.xlane.xlu0 %270
          %v272 = vld [vmem:[%s1] sm:$0x3]
          %vm273 = vcmask 261120
          %v275 = vsel %vm273, %v272, 0
          %277 = vmatprep.subr.mxu0 0.0
          %278 = vmatpush1.msra.mxu0 %v262
          %279 = vmatprep.subr.mxu0 0.0
          %280 = vmatpush1.msra.mxu0 %v265
          %281 = vmatprep.subr.mxu0 0.0
          %282 = vmatpush1.msra.mxu0 %v268
          %283 = vmatprep.subr.mxu0 0.0
          %284 = vmatpush1.msra.mxu0 %v271
          %285 = vmatprep.subr.mxu0 0.0
          %286 = vmatpush1.msra.mxu0 0.0
          %287 = vmatprep.subr.mxu0 0.0
          %288 = vmatpush1.msra.mxu0 0.0
          %289 = vmatprep.subr.mxu0 0.0
          %290 = vmatpush1.msra.mxu0 0.0
          %291 = vmatprep.subr.mxu0 0.0
          %292 = vmatpush1.msra.mxu0 0.0
          %293 = vmatprep.subr.mxu0 0.0
          %294 = vmatpush1.msra.mxu0 0.0
          %295 = vmatprep.subr.mxu0 0.0
          %296 = vmatpush1.msra.mxu0 0.0
          %297 = vmatprep.subr.mxu0 0.0
          %298 = vmatpush1.msra.mxu0 0.0
          %299 = vmatprep.subr.mxu0 0.0
          %300 = vmatpush1.msra.mxu0 0.0
          %301 = vmatprep.subr.mxu0 0.0
          %302 = vmatpush1.msra.mxu0 0.0
          %303 = vmatprep.subr.mxu0 0.0
          %304 = vmatpush1.msra.mxu0 0.0
          %305 = vmatprep.subr.mxu0 0.0
          %306 = vmatpush1.msra.mxu0 0.0
          %307 = vmatprep.subr.mxu0 0.0
          %308 = vmatpush1.msra.mxu0 0.0
          %309 = vmatprep.subr.mxu0 0.0
          %310 = vmatpush1.msra.mxu0 0.0
          %311 = vmatprep.subr.mxu0 0.0
          %312 = vmatpush1.msra.mxu0 0.0
          %313 = vmatprep.subr.mxu0 0.0
          %314 = vmatpush1.msra.mxu0 0.0
          %315 = vmatprep.subr.mxu0 0.0
          %316 = vmatpush1.msra.mxu0 0.0
          %317 = vmatprep.subr.mxu0 0.0
          %318 = vmatpush1.msra.mxu0 0.0
          %319 = vmatprep.subr.mxu0 0.0
          %320 = vmatpush1.msra.mxu0 0.0
          %321 = vmatprep.subr.mxu0 0.0
          %322 = vmatpush1.msra.mxu0 0.0
          %323 = vmatprep.subr.mxu0 0.0
          %324 = vmatpush1.msra.mxu0 0.0
          %325 = vmatprep.subr.mxu0 0.0
          %326 = vmatpush1.msra.mxu0 0.0
          %327 = vmatprep.subr.mxu0 0.0
          %328 = vmatpush1.msra.mxu0 0.0
          %329 = vmatprep.subr.mxu0 0.0
          %330 = vmatpush1.msra.mxu0 0.0
          %331 = vmatprep.subr.mxu0 0.0
          %332 = vmatpush1.msra.mxu0 0.0
          %333 = vmatprep.subr.mxu0 0.0
          %334 = vmatpush1.msra.mxu0 0.0
          %335 = vmatprep.subr.mxu0 0.0
          %336 = vmatpush1.msra.mxu0 0.0
          %337 = vmatprep.subr.mxu0 0.0
          %338 = vmatpush1.msra.mxu0 0.0
          %339 = vmatprep.subr.mxu0 0.0
          %340 = vmatpush1.msra.mxu0 0.0
          %341 = vmatprep.mubr.f32.mxu0 0.0
          %342 = vmatmul.mubr.f32.gmra.mrb[0].mxu0 %v275
          %v343 = vpop.f32.mrb[0].mxu0
          %v344 = vadd.f32 0.0, %v343
          %v345 = vpop.f32.mrb[0].mxu0
          %346 = vdwg.mxu0
          %v347 = vmax.f32 %v344, 0.0
          %v348 = vld [vmem:[%s2] sm:$0xff]
          %v349 = vld [vmem:[%s2 + $0x8] sm:$0xff]
          %v350 = vld [vmem:[%s2 + $0x10] sm:$0xff]
          %v351 = vld [vmem:[%s2 + $0x18] sm:$0xff]
          %vm352 = vcmask 15360
          %v354 = vsel %vm352, %v348, 0
          %v357 = vsel %vm352, %v349, 0
          %v360 = vsel %vm352, %v350, 0
          %v363 = vsel %vm352, %v351, 0
          %vm365 = vcmask 1041408
          %v367 = vsel %vm365, %v347, 0
          %369 = vmatprep.subr.mxu0 0.0
          %370 = vmatpush1.msra.mxu0 %v367
          %371 = vmatprep.subr.mxu0 0.0
          %372 = vmatpush1.msra.mxu0 0.0
          %373 = vmatprep.subr.mxu0 0.0
          %374 = vmatpush1.msra.mxu0 0.0
          %375 = vmatprep.subr.mxu0 0.0
          %376 = vmatpush1.msra.mxu0 0.0
          %377 = vmatprep.subr.mxu0 0.0
          %378 = vmatpush1.msra.mxu0 0.0
          %379 = vmatprep.subr.mxu0 0.0
          %380 = vmatpush1.msra.mxu0 0.0
          %381 = vmatprep.subr.mxu0 0.0
          %382 = vmatpush1.msra.mxu0 0.0
          %383 = vmatprep.subr.mxu0 0.0
          %384 = vmatpush1.msra.mxu0 0.0
          %385 = vmatprep.subr.mxu0 0.0
          %386 = vmatpush1.msra.mxu0 0.0
          %387 = vmatprep.subr.mxu0 0.0
          %388 = vmatpush1.msra.mxu0 0.0
          %389 = vmatprep.subr.mxu0 0.0
          %390 = vmatpush1.msra.mxu0 0.0
          %391 = vmatprep.subr.mxu0 0.0
          %392 = vmatpush1.msra.mxu0 0.0
          %393 = vmatprep.subr.mxu0 0.0
          %394 = vmatpush1.msra.mxu0 0.0
          %395 = vmatprep.subr.mxu0 0.0
          %396 = vmatpush1.msra.mxu0 0.0
          %397 = vmatprep.subr.mxu0 0.0
          %398 = vmatpush1.msra.mxu0 0.0
          %399 = vmatprep.subr.mxu0 0.0
          %400 = vmatpush1.msra.mxu0 0.0
          %401 = vmatprep.subr.mxu0 0.0
          %402 = vmatpush1.msra.mxu0 0.0
          %403 = vmatprep.subr.mxu0 0.0
          %404 = vmatpush1.msra.mxu0 0.0
          %405 = vmatprep.subr.mxu0 0.0
          %406 = vmatpush1.msra.mxu0 0.0
          %407 = vmatprep.subr.mxu0 0.0
          %408 = vmatpush1.msra.mxu0 0.0
          %409 = vmatprep.subr.mxu0 0.0
          %410 = vmatpush1.msra.mxu0 0.0
          %411 = vmatprep.subr.mxu0 0.0
          %412 = vmatpush1.msra.mxu0 0.0
          %413 = vmatprep.subr.mxu0 0.0
          %414 = vmatpush1.msra.mxu0 0.0
          %415 = vmatprep.subr.mxu0 0.0
          %416 = vmatpush1.msra.mxu0 0.0
          %417 = vmatprep.subr.mxu0 0.0
          %418 = vmatpush1.msra.mxu0 0.0
          %419 = vmatprep.subr.mxu0 0.0
          %420 = vmatpush1.msra.mxu0 0.0
          %421 = vmatprep.subr.mxu0 0.0
          %422 = vmatpush1.msra.mxu0 0.0
          %423 = vmatprep.subr.mxu0 0.0
          %424 = vmatpush1.msra.mxu0 0.0
          %425 = vmatprep.subr.mxu0 0.0
          %426 = vmatpush1.msra.mxu0 0.0
          %427 = vmatprep.subr.mxu0 0.0
          %428 = vmatpush1.msra.mxu0 0.0
          %429 = vmatprep.subr.mxu0 0.0
          %430 = vmatpush1.msra.mxu0 0.0
          %431 = vmatprep.subr.mxu0 0.0
          %432 = vmatpush1.msra.mxu0 0.0
          %433 = vmatprep.mubr.f32.mxu0 0.0
          %434 = vmatmul.mubr.f32.gmra.mrb[0].mxu0 %v354
          %v435 = vpop.f32.mrb[0].mxu0
          %v436 = vadd.f32 0.0, %v435
          %v437 = vpop.f32.mrb[0].mxu0
          %438 = vmatprep.mubr.f32.mxu0 0.0
          %439 = vmatmul.mubr.f32.gmra.mrb[0].mxu0 %v357
          %v440 = vpop.f32.mrb[0].mxu0
          %v441 = vadd.f32 0.0, %v440
          %v442 = vpop.f32.mrb[0].mxu0
          %443 = vmatprep.mubr.f32.mxu0 0.0
          %444 = vmatmul.mubr.f32.gmra.mrb[0].mxu0 %v360
          %v445 = vpop.f32.mrb[0].mxu0
          %v446 = vadd.f32 0.0, %v445
          %v447 = vpop.f32.mrb[0].mxu0
          %448 = vmatprep.mubr.f32.mxu0 0.0
          %449 = vmatmul.mubr.f32.gmra.mrb[0].mxu0 %v363
          %v450 = vpop.f32.mrb[0].mxu0
          %v451 = vadd.f32 0.0, %v450
          %v452 = vpop.f32.mrb[0].mxu0
          %453 = vdwg.mxu0
          %v454 = vxor.u32 %v436, 2147483648
          %v455 = vxor.u32 %v441, 2147483648
          %v456 = vxor.u32 %v446, 2147483648
          %v457 = vxor.u32 %v451, 2147483648
          %v458 = vmul.f32 %v454, 1.442695
          %v459 = vpow.pop %v458
          %v460 = vmul.f32 %v455, 1.442695
          %v461 = vpow.pop %v460
          %v462 = vmul.f32 %v456, 1.442695
          %v463 = vpow.pop %v462
          %v464 = vmul.f32 %v457, 1.442695
          %v465 = vpow.pop %v464
          %v466 = vadd.f32 %v459, 1.0
          %v467 = vadd.f32 %v461, 1.0
          %v468 = vadd.f32 %v463, 1.0
          %v469 = vadd.f32 %v465, 1.0
          %v470 = vrcp.pop %v466
          %v471 = vmul.f32 1.0, %v470
          %v472 = vrcp.pop %v467
          %v473 = vmul.f32 1.0, %v472
          %v474 = vrcp.pop %v468
          %v475 = vmul.f32 1.0, %v474
          %v476 = vrcp.pop %v469
          %v477 = vmul.f32 1.0, %v476
          %482 = vset.pattern.permute.xlu0 0
          %483 = vperm.xlu0 %482, %v471
          %v484 = vpop.permute.xlu0 %483
          %485 = vset.pattern.permute.xlu0 0
          %486 = vperm.xlu0 %485, %v473
          %v487 = vpop.permute.xlu0 %486
          %488 = vset.pattern.permute.xlu0 0
          %489 = vperm.xlu0 %488, %v475
          %v490 = vpop.permute.xlu0 %489
          %491 = vset.pattern.permute.xlu0 0
          %492 = vperm.xlu0 %491, %v477
          %v493 = vpop.permute.xlu0 %492
          %v494 = vlaneseq
          %v495 = vand.u32 %v494, 127
          %v496 = vlaneseq
          %v497 = vshrl.u32 %v496, 7
          %v498 = vsub.s32 %v495, %v497
          %v499 = vrot.slane %v484, %v498
          %v500 = vadd.s32 %v495, 4294967288
          %v501 = vlaneseq
          %v502 = vshrl.u32 %v501, 7
          %v503 = vsub.s32 %v500, %v502
          %v504 = vrot.slane %v487, %v503
          %vm505 = vcmask 130112
          %v506 = vsel %vm505, %v504, %v499
          %v507 = vadd.s32 %v495, 4294967280
          %v508 = vlaneseq
          %v509 = vshrl.u32 %v508, 7
          %v510 = vsub.s32 %v507, %v509
          %v511 = vrot.slane %v490, %v510
          %vm512 = vcmask 195712
          %v513 = vsel %vm512, %v511, %v506
          %v514 = vadd.s32 %v495, 4294967272
          %v515 = vlaneseq
          %v516 = vshrl.u32 %v515, 7
          %v517 = vsub.s32 %v514, %v516
          %v518 = vrot.slane %v493, %v517
          %vm519 = vcmask 261312
          %v520 = vsel %vm519, %v518, %v513
          %vm522 = vcmask 253952
          %523 = vst.msk [vmem:[%s203] sm:$0x1] %vm522, %v520
        $region44: #{tpu_custom_call.1} parent=31 // pred_fallthru
          _
        %s524 = sand.u32 %s110, 1
        %s525 = scalar_lea.sflag [#allocation5], %s524
        %s526 = sand.u32 %s110, 1
        %s527 = scalar_lea.vmem [#allocation6], %s526
        // Predicated region
        $region45: #{tpu_custom_call.1} parent=31 // pred_check
          %p528 = pneg %p120
        $region46: #{tpu_custom_call.1} parent=31 // pred_check_branch
          %530 = sbr.rel (%p528) target = $region48
        $region47: #{tpu_custom_call.1} parent=31 // pred_region
          %s532 = ssub.s32 16, 16
          %533 = vsyncadd %s525, %s532
          %s534 = smul.addr %s24, 16
          %s535 = scalar_lea.hbm %s3, %s534
          %s537 = sshll.u32 %s527, 4
          %s538 = int_to_ptr.vmem [resolvable:$true] %s537
          %540 = dma.vmem_to_hbm [thread:$0]  %s538, 16, %s535, %s525
        $region48: #{tpu_custom_call.1} parent=31 // pred_fallthru
          _
      $region32: #{tpu_custom_call.1} parent=5 // pred_fallthru
        _
      %p541 = scmp.le.s32.totalorder 2, %s15
      // Predicated region
      $region49: #{tpu_custom_call.1} parent=5 // pred_check
        %p542 = pneg %p541
      $region50: #{tpu_custom_call.1} parent=5 // pred_check_branch
        %544 = sbr.rel (%p542) target = $region52
      $region51: #{tpu_custom_call.1} parent=5 // pred_region
        %s545 = ssub.s32 %s15, 2
        // Predicated region
        $region53: #{tpu_custom_call.1} parent=51 // pred_check
          %p546 = pneg %p126
        $region54: #{tpu_custom_call.1} parent=51 // pred_check_branch
          %548 = sbr.rel (%p546) target = $region56
        $region55: #{tpu_custom_call.1} parent=51 // pred_region
          %s549 = sand.u32 %s111, 1
          %s550 = scalar_lea.sflag [#allocation5], %s549
          %s551 = sand.u32 %s111, 1
          %s552 = scalar_lea.vmem [#allocation6], %s551
          %553 = dma.done %s550, 16
        $region56: #{tpu_custom_call.1} parent=51 // pred_fallthru
          _
      $region52: #{tpu_custom_call.1} parent=5 // pred_fallthru
        _
    $region6: #{tpu_custom_call.1} parent=1 // loop_footer
      %s19 = sadd.s32 1, %s15
    $region7: #{tpu_custom_call.1} parent=1 // loop_footer_branch
      %14 = sbr.rel target = $region3
    $region8: #{tpu_custom_call.1} parent=1 // loop_exit
      _
    %554 = vsyncpa [#allocation4], 1
    %s555 = scalar_lea.sflag [#allocation4], 1
    %556 = vsyncpa %s555, 1
    %557 = vsyncpa [#allocation5], 1
    %s558 = scalar_lea.sflag [#allocation5], 1
    %559 = vsyncpa %s558, 1

</llo_original>
